<compile_context>
chip_gen: v5e
topology: v5e:2x2
jax: 0.10.0
libtpu: 0.0.40
codegen_flags: <defaults>
</compile_context>

<pallas_src>
import jax
import jax.numpy as jnp
from jax.experimental import pallas as pl
from jax.experimental.pallas import tpu as pltpu


def _round_up(x, m):
    return ((x + m - 1) // m) * m


def _seghead_kernel(mask_ref, hs_ref, out_ref):
    # mask_ref: (Q, C) f32 (resident per batch); hs_ref: (C, TN) f32 tile;
    # out_ref: (Q, TN) f32.  Cast both MXU operands to bf16 in-kernel (v5e has
    # no native f32 MXU path; on all chips this keeps compute fully hidden).
    m = mask_ref[...].astype(jnp.bfloat16)
    h = hs_ref[...].astype(jnp.bfloat16)
    out_ref[...] = jnp.dot(m, h, preferred_element_type=jnp.float32)


def _vmem_tile_budget_bytes():
    # Budget used only for sizing the spatial tile: ~3/4 of physical VMEM,
    # capped at 40 MiB so v7x (64 MiB physical) keeps 2-deep pipelining.
    try:
        cap = int(pltpu.get_tpu_info().vmem_capacity_bytes)
        return min((cap * 3) // 4, 40 << 20)
    except Exception:
        return 40 << 20


def _choose_tile(hw_pad, c, q, batch, budget):
    """Largest lane-dense tile width that (a) evenly divides hw_pad (no
    padding slop, output slice stays metadata-only), (b) fits double-buffered
    f32 hs+out tiles in the VMEM budget, (c) is at most 8192."""
    per_lane = 2 * (c * 4 + q * 4)          # double-buffered hs + out, f32
    mask_bytes = 2 * q * c * 4              # resident mask block (2 buffers)
    tn_cap = max(128, min(8192, hw_pad,
                          (budget - mask_bytes) // max(per_lane, 1)))
    m = hw_pad // 128
    d_cap = max(1, min(tn_cap // 128, m))
    divisors = [d for d in range(1, d_cap + 1) if m % d == 0]
    best = max(divisors)
    # v7x: 2 TensorCores shard the parallel grid; prefer an even number of
    # total steps as long as the tile stays within 2x of the largest choice.
    even = [d for d in divisors if (batch * (m // d)) % 2 == 0]
    if even and max(even) * 2 >= best:
        best = max(even)
    return 128 * best


def kan_seg_head(mask_embed, hs_map):
    """mask_embed: [B, Q, C]; hs_map: [B, C, H, W] -> [B, Q, H, W] float32."""
    B, Q, C = mask_embed.shape
    Bh, Ch, H, W = hs_map.shape
    assert B == Bh and C == Ch
    HW = H * W

    hw_pad = _round_up(max(HW, 128), 128)
    budget = _vmem_tile_budget_bytes()
    tn = _choose_tile(hw_pad, C, Q, B, budget)
    n_hw_tiles = hw_pad // tn

    # hs_map stays f32; the reshape to (B, C, HW) is metadata-only.  Padding
    # along HW happens only when HW is not already 128-aligned.
    hs = hs_map.reshape(B, C, HW)
    if hw_pad != HW:
        hs = jnp.pad(hs, ((0, 0), (0, 0), (0, hw_pad - HW)))

    # Keep vmem_limit close to actual usage (don't starve neighboring fusions).
    usage = 2 * (C * tn * 4 + Q * tn * 4) + 2 * Q * C * 4
    vmem_limit = int(min(48 << 20, max(16 << 20, (usage * 3) // 2)))

    flops = 2 * B * Q * C * hw_pad
    bytes_accessed = B * (Q * C * 4 + C * hw_pad * 4 + Q * hw_pad * 4)

    out = pl.pallas_call(
        _seghead_kernel,
        out_shape=jax.ShapeDtypeStruct((B, Q, hw_pad), jnp.float32),
        grid_spec=pltpu.PrefetchScalarGridSpec(
            num_scalar_prefetch=0,
            grid=(B, n_hw_tiles),
            in_specs=[
                # mask_embed: full (Q, C) block, constant over j -> one DMA
                # per batch.  Block dims equal the full array dims, so no
                # padding of Q or C is needed.
                pl.BlockSpec((pl.Squeezed(), Q, C), lambda b, j: (b, 0, 0)),
                # hs_map: (C, TN) spatial tile, pipelined along j.
                pl.BlockSpec((pl.Squeezed(), C, tn), lambda b, j: (b, 0, j)),
            ],
            out_specs=pl.BlockSpec((pl.Squeezed(), Q, tn),
                                   lambda b, j: (b, 0, j)),
        ),
        compiler_params=pltpu.CompilerParams(
            dimension_semantics=("parallel", "parallel"),
            vmem_limit_bytes=vmem_limit,
        ),
        cost_estimate=pl.CostEstimate(
            flops=flops, transcendentals=0, bytes_accessed=bytes_accessed
        ),
    )(mask_embed.astype(jnp.float32), hs)

    if hw_pad != HW:
        out = out[:, :, :HW]
    return out.reshape(B, Q, H, W)


if __name__ == "__main__":
    key = jax.random.PRNGKey(0)
    k1, k2 = jax.random.split(key)

    B, Q, C, H, W = 2, 8, 32, 16, 16
    mask_embed = jax.random.normal(k1, (B, Q, C), dtype=jnp.float32)
    hs_map = jax.random.normal(k2, (B, C, H, W), dtype=jnp.float32)

    out = kan_seg_head(mask_embed, hs_map)
    out = jax.block_until_ready(out)

    # Reference check against plain-JAX einsum (same semantics as the PyTorch
    # einsum "bqc,bchw->bqhw").  Tolerance covers in-kernel bf16 operands.
    ref = jnp.einsum("bqc,bchw->bqhw", mask_embed, hs_map)
    assert out.shape == (B, Q, H, W)
    assert jnp.allclose(out, ref, atol=5e-2, rtol=5e-2), float(
        jnp.max(jnp.abs(out - ref))
    )

    print("KERNEL_OK")
</pallas_src>

<mosaic_0001>
module attributes {stable_mosaic.version = 11 : i64} {
  func.func @_seghead_kernel(%arg0: i32, %arg1: i32, %arg2: memref<1x8x32xf32, #tpu.memory_space<vmem>>, %arg3: memref<1x32x256xf32, #tpu.memory_space<vmem>>, %arg4: memref<1x8x256xf32, #tpu.memory_space<vmem>>) attributes {dimension_semantics = [#tpu.dimension_semantics<parallel>, #tpu.dimension_semantics<parallel>], iteration_bounds = array<i64: 2, 1>, scalar_prefetch = 0 : i64, scratch_operands = 0 : i64, tpu.core_type = #tpu.core_type<tc>, window_params = [{transform_indices = @transform_0, window_bounds = array<i64: 1, 8, 32>}, {transform_indices = @transform_1, window_bounds = array<i64: 1, 32, 256>}, {transform_indices = @transform_2, window_bounds = array<i64: 1, 8, 256>}]} {
    %c0 = arith.constant 0 : index
    %c0_0 = arith.constant 0 : index
    %c0_1 = arith.constant 0 : index
    %0 = vector.load %arg2[%c0, %c0_0, %c0_1] : memref<1x8x32xf32, #tpu.memory_space<vmem>>, vector<1x8x32xf32>
    %1 = vector.shape_cast %0 : vector<1x8x32xf32> to vector<8x32xf32>
    %2 = arith.truncf %1 : vector<8x32xf32> to vector<8x32xbf16>
    %c0_2 = arith.constant 0 : index
    %c0_3 = arith.constant 0 : index
    %c0_4 = arith.constant 0 : index
    %3 = vector.load %arg3[%c0_2, %c0_3, %c0_4] : memref<1x32x256xf32, #tpu.memory_space<vmem>>, vector<1x32x256xf32>
    %4 = vector.shape_cast %3 : vector<1x32x256xf32> to vector<32x256xf32>
    %5 = arith.truncf %4 : vector<32x256xf32> to vector<32x256xbf16>
    %cst = arith.constant dense<0.000000e+00> : vector<8x256xf32>
    %6 = tpu.matmul %2, %5, %cst {dimension_numbers = #tpu.dot_dimension_numbers<[1], [0], [0], [1], [0, 0, 1, 1], [], []>} : vector<8x32xbf16>, vector<32x256xbf16>, vector<8x256xf32> -> vector<8x256xf32>
    %c0_5 = arith.constant 0 : index
    %c0_6 = arith.constant 0 : index
    %c0_7 = arith.constant 0 : index
    %7 = vector.load %arg4[%c0_5, %c0_6, %c0_7] : memref<1x8x256xf32, #tpu.memory_space<vmem>>, vector<1x8x256xf32>
    %8 = vector.shape_cast %7 : vector<1x8x256xf32> to vector<8x256xf32>
    %9 = vector.shape_cast %6 : vector<8x256xf32> to vector<1x8x256xf32>
    tpu.vector_store %arg4[%c0_5, %c0_6, %c0_7], %9 {strides = array<i32>} : memref<1x8x256xf32, #tpu.memory_space<vmem>>, vector<1x8x256xf32>,
    return
  }
  func.func @transform_0(%arg0: i32, %arg1: i32) -> (i32, i32, i32) {
    %c0_i32 = arith.constant 0 : i32
    %c0_i32_0 = arith.constant 0 : i32
    %c0_i32_1 = arith.constant 0 : i32
    return %arg0, %c0_i32, %c0_i32_0 : i32, i32, i32
  }
  func.func @transform_1(%arg0: i32, %arg1: i32) -> (i32, i32, i32) {
    %c0_i32 = arith.constant 0 : i32
    %c0_i32_0 = arith.constant 0 : i32
    return %arg0, %c0_i32, %arg1 : i32, i32, i32
  }
  func.func @transform_2(%arg0: i32, %arg1: i32) -> (i32, i32, i32) {
    %c0_i32 = arith.constant 0 : i32
    %c0_i32_0 = arith.constant 0 : i32
    return %arg0, %c0_i32, %arg1 : i32, i32, i32
  }
}

</mosaic_0001>

<llo_original>
// kernel: tpu_custom_call.1
$region0: #{tpu_custom_call.1}
  #allocation0 [shape = 'u32[]', space=smem, size = 0x4, offset = 0x4, fixed_abs, tag = 'smem constant byte address 0x4 - core index']
  #allocation1 [shape = 'u32[72,128]{1,0:T(1,128)}', space=vmem, size = 0x9000, scoped, tag = 'internal scratch']
  %s0 = inlined_call_operand.hbm [shape: f32[2,8,32], index: 0, kind: input, shape index: {}]
  %s1 = inlined_call_operand.hbm [shape: f32[2,32,256], index: 1, kind: input, shape index: {}]
  %s2 = inlined_call_operand.hbm [shape: f32[2,8,256], index: 2, kind: output, shape index: {}]
  %s3 = sld [smem:[#allocation0]]
  $region49: #{tpu_custom_call.1} parent=0
    _
  %s5 = ssub.s32 1, %s3
  %s6 = scalar_select 0, %s5, %s3
  $region1: #{tpu_custom_call.1} parent=0
    #allocation2 [shape = 'u8[8192]{0}', space=vmem, size = 0x2000, scoped, tag = 'input window, operand 0']
    #allocation3 [shape = 's32[2]{0}', space=sflag, size = 0x8, scoped, tag = 'scoped memory for tpu_custom_call.1']
    #allocation4 [shape = 's32[2]{0}', space=sflag, size = 0x8, scoped, tag = 'scoped memory for tpu_custom_call.1']
    #allocation5 [shape = 'u8[65536]{0}', space=vmem, size = 0x10000, scoped, tag = 'input window, operand 1']
    #allocation6 [shape = 's32[2]{0}', space=sflag, size = 0x8, scoped, tag = 'scoped memory for tpu_custom_call.1']
    #allocation7 [shape = 'u8[16384]{0}', space=vmem, size = 0x4000, scoped, tag = 'output window, operand 0']
    %7 = vsyncpa [#allocation3], 0
    %s8 = scalar_lea.sflag [#allocation3], 1
    %9 = vsyncpa %s8, 0
    %10 = vsyncpa [#allocation6], 0
    %s11 = scalar_lea.sflag [#allocation6], 1
    %12 = vsyncpa %s11, 0
    %13 = vsyncpa [#allocation4], 0
    %s14 = scalar_lea.sflag [#allocation4], 1
    %15 = vsyncpa %s14, 0
    loop: start=0, step=1, limit=4
    $region2: #{tpu_custom_call.1} parent=1 // loop_pre_header
      _
    $region3: #{tpu_custom_call.1} parent=1 // loop_header
      %s17 = sphi 0, %s21
      %p18 = scmp.ge.s32.totalorder %s17, 4
      %s24 = sphi 0, %s36
      %s25 = sphi 0, %s32
      %s26 = sphi 0, %s24
      %s27 = sphi 0, %s25
      %s28 = sphi 0, %s26
      %s29 = sphi 0, %s27
      %s39 = sphi 0, %s41
      %s42 = sphi 0, %s39
      %s43 = sphi 0, %s42
      %s59 = sphi 0, %s43
      %s67 = sphi 0, %s69
      %s70 = sphi 0, %s67
      %s71 = sphi 0, %s70
      %s87 = sphi 0, %s71
      %s95 = sphi 0, %s97
      %s98 = sphi 0, %s95
      %s99 = sphi 0, %s98
      %s115 = sphi 0, %s99
    $region4: #{tpu_custom_call.1} parent=1 // loop_header_branch
      %20 = sbr.rel (%p18) target = $region8
    $region5: #{tpu_custom_call.1} parent=1 // loop_body
      %s22 = ssub.s32 %s17, 1
      %s23 = ssub.s32 %s17, 2
      %s30 = sadd.s32 1, %s25
      %p31 = scmp.ge.s32.totalorder %s30, 1
      %s32 = scalar_select %p31, 0, %s30
      %s33 = sadd.s32 1, %s24
      %s34 = scalar_select %p31, %s33, %s24
      %p35 = scmp.ge.s32.totalorder %s34, 2
      %s36 = scalar_select %p35, 0, %s34
      %s37 = ssub.s32 %s24, %s36
      %p38 = scmp.eq.s32.totalorder %s37, 0
      %s40 = sadd.s32 %s39, 1
      %s41 = scalar_select %p38, %s39, %s40
      %p44 = pneg %p38
      %p45 = scmp.eq.s32.totalorder %s17, 1
      %p46 = por %p44, %p45
      %p47 = scmp.ne.s32.totalorder %s39, %s42
      %p48 = scmp.eq.s32.totalorder %s17, 0
      %p49 = por %p47, %p48
      %p50 = scmp.ne.s32.totalorder %s39, %s42
      %p51 = scmp.eq.s32.totalorder %s22, 1
      %p52 = por %p50, %p51
      %p53 = scmp.ne.s32.totalorder %s42, %s43
      %p54 = scmp.eq.s32.totalorder %s22, 0
      %p55 = por %p53, %p54
      %p56 = scmp.ne.s32.totalorder %s42, %s43
      %p57 = scmp.eq.s32.totalorder %s23, 1
      %p58 = por %p56, %p57
      %p60 = scmp.ne.s32.totalorder %s43, %s59
      %p61 = scmp.eq.s32.totalorder %s23, 0
      %p62 = por %p60, %p61
      %s63 = ssub.s32 %s24, %s36
      %s64 = ssub.s32 %s25, %s32
      %s65 = sor.u32 %s63, %s64
      %p66 = scmp.eq.s32.totalorder %s65, 0
      %s68 = sadd.s32 %s67, 1
      %s69 = scalar_select %p66, %s67, %s68
      %p72 = pneg %p66
      %p73 = scmp.eq.s32.totalorder %s17, 1
      %p74 = por %p72, %p73
      %p75 = scmp.ne.s32.totalorder %s67, %s70
      %p76 = scmp.eq.s32.totalorder %s17, 0
      %p77 = por %p75, %p76
      %p78 = scmp.ne.s32.totalorder %s67, %s70
      %p79 = scmp.eq.s32.totalorder %s22, 1
      %p80 = por %p78, %p79
      %p81 = scmp.ne.s32.totalorder %s70, %s71
      %p82 = scmp.eq.s32.totalorder %s22, 0
      %p83 = por %p81, %p82
      %p84 = scmp.ne.s32.totalorder %s70, %s71
      %p85 = scmp.eq.s32.totalorder %s23, 1
      %p86 = por %p84, %p85
      %p88 = scmp.ne.s32.totalorder %s71, %s87
      %p89 = scmp.eq.s32.totalorder %s23, 0
      %p90 = por %p88, %p89
      %s91 = ssub.s32 %s24, %s36
      %s92 = ssub.s32 %s25, %s32
      %s93 = sor.u32 %s91, %s92
      %p94 = scmp.eq.s32.totalorder %s93, 0
      %s96 = sadd.s32 %s95, 1
      %s97 = scalar_select %p94, %s95, %s96
      %p100 = pneg %p94
      %p101 = scmp.eq.s32.totalorder %s17, 1
      %p102 = por %p100, %p101
      %p103 = scmp.ne.s32.totalorder %s95, %s98
      %p104 = scmp.eq.s32.totalorder %s17, 0
      %p105 = por %p103, %p104
      %p106 = scmp.ne.s32.totalorder %s95, %s98
      %p107 = scmp.eq.s32.totalorder %s22, 1
      %p108 = por %p106, %p107
      %p109 = scmp.ne.s32.totalorder %s98, %s99
      %p110 = scmp.eq.s32.totalorder %s22, 0
      %p111 = por %p109, %p110
      %p112 = scmp.ne.s32.totalorder %s98, %s99
      %p113 = scmp.eq.s32.totalorder %s23, 1
      %p114 = por %p112, %p113
      %p116 = scmp.ne.s32.totalorder %s99, %s115
      %p117 = scmp.eq.s32.totalorder %s23, 0
      %p118 = por %p116, %p117
      %p119 = scmp.le.s32.totalorder 1, %s17
      %p120 = scmp.lt.s32.totalorder %s17, 3
      %p121 = pnand %p119, %p120
      %p122 = pneg %p121
      // Predicated region
      $region9: #{tpu_custom_call.1} parent=5 // pred_check
        _
      $region10: #{tpu_custom_call.1} parent=5 // pred_check_branch
        %124 = sbr.rel (%p121) target = $region12
      $region11: #{tpu_custom_call.1} parent=5 // pred_region
        %s125 = ssub.s32 %s17, 1
      $region12: #{tpu_custom_call.1} parent=5 // pred_fallthru
        _
      %p126 = scmp.lt.s32.totalorder %s17, 2
      // Predicated region
      $region13: #{tpu_custom_call.1} parent=5 // pred_check
        %p127 = pneg %p126
      $region14: #{tpu_custom_call.1} parent=5 // pred_check_branch
        %129 = sbr.rel (%p127) target = $region16
      $region15: #{tpu_custom_call.1} parent=5 // pred_region
        // Predicated region
        $region17: #{tpu_custom_call.1} parent=15 // pred_check
          %p130 = pneg %p49
        $region18: #{tpu_custom_call.1} parent=15 // pred_check_branch
          %132 = sbr.rel (%p130) target = $region20
        $region19: #{tpu_custom_call.1} parent=15 // pred_region
          %s133 = sand.u32 %s39, 1
          %s134 = scalar_lea.sflag [#allocation3], %s133
          %s135 = sand.u32 %s39, 1
          %s136 = smul.addr %s135, 8
          %s137 = scalar_lea.vmem [#allocation2], %s136
          %139 = vsyncadd %s134, 0
          %s140 = smul.addr %s24, 8
          %s141 = scalar_lea.hbm %s0, %s140
          %s143 = sshll.u32 %s141, 4
          %s144 = int_to_ptr.hbm [resolvable:$true] %s143
          %s145 = sshll.u32 %s137, 4
          %s146 = int_to_ptr.vmem [resolvable:$true] %s145
          %148 = dma.hbm_to_vmem [thread:$0]  %s144, 128, %s146, %s134
        $region20: #{tpu_custom_call.1} parent=15 // pred_fallthru
          _
        // Predicated region
        $region21: #{tpu_custom_call.1} parent=15 // pred_check
          %p149 = pneg %p77
        $region22: #{tpu_custom_call.1} parent=15 // pred_check_branch
          %151 = sbr.rel (%p149) target = $region24
        $region23: #{tpu_custom_call.1} parent=15 // pred_region
          %s152 = sand.u32 %s67, 1
          %s153 = scalar_lea.sflag [#allocation6], %s152
          %s154 = sand.u32 %s67, 1
          %s155 = smul.addr %s154, 64
          %s156 = scalar_lea.vmem [#allocation5], %s155
          %s157 = smul.u32 2, %s25
          %159 = vsyncadd %s153, 0
          %s160 = smul.addr %s24, 8
          %s161 = sadd.s32 %s157, %s160
          %s162 = smul.addr %s161, 8
          %s163 = scalar_lea.hbm %s1, %s162
          %s164 = sshll.u32 %s163, 4
          %s165 = int_to_ptr.hbm [resolvable:$true] %s164
          %s166 = sshll.u32 %s156, 4
          %s167 = int_to_ptr.vmem [resolvable:$true] %s166
          %172 = dma.hbm_to_vmem [thread:$0]  %s165, 1024, %s167, %s153, 256, 256, 16
        $region24: #{tpu_custom_call.1} parent=15 // pred_fallthru
          _
      $region16: #{tpu_custom_call.1} parent=5 // pred_fallthru
        _
      %p173 = scmp.le.s32.totalorder 1, %s17
      %p174 = scmp.lt.s32.totalorder %s17, 3
      %p175 = pnand %p173, %p174
      %p176 = pneg %p175
      // Predicated region
      $region25: #{tpu_custom_call.1} parent=5 // pred_check
        _
      $region26: #{tpu_custom_call.1} parent=5 // pred_check_branch
        %178 = sbr.rel (%p175) target = $region28
      $region27: #{tpu_custom_call.1} parent=5 // pred_region
        %s179 = ssub.s32 %s17, 1
        %s180 = sand.u32 %s42, 1
        %s181 = scalar_lea.sflag [#allocation3], %s180
        %s182 = sand.u32 %s42, 1
        %s183 = smul.addr %s182, 8
        %s184 = scalar_lea.vmem [#allocation2], %s183
        // Predicated region
        $region29: #{tpu_custom_call.1} parent=27 // pred_check
          %p185 = pneg %p55
        $region30: #{tpu_custom_call.1} parent=27 // pred_check_branch
          %187 = sbr.rel (%p185) target = $region32
        $region31: #{tpu_custom_call.1} parent=27 // pred_region
          %189 = dma.done %s181, 128
        $region32: #{tpu_custom_call.1} parent=27 // pred_fallthru
          _
        %s190 = sand.u32 %s70, 1
        %s191 = scalar_lea.sflag [#allocation6], %s190
        %s192 = sand.u32 %s70, 1
        %s193 = smul.addr %s192, 64
        %s194 = scalar_lea.vmem [#allocation5], %s193
        // Predicated region
        $region33: #{tpu_custom_call.1} parent=27 // pred_check
          %p195 = pneg %p83
        $region34: #{tpu_custom_call.1} parent=27 // pred_check_branch
          %197 = sbr.rel (%p195) target = $region36
        $region35: #{tpu_custom_call.1} parent=27 // pred_region
          %199 = dma.done %s191, 1024
        $region36: #{tpu_custom_call.1} parent=27 // pred_fallthru
          _
        %s200 = sand.u32 %s42, 1
        %s201 = scalar_lea.sflag [#allocation3], %s200
        %s202 = sand.u32 %s42, 1
        %s203 = smul.addr %s202, 8
        %s204 = scalar_lea.vmem [#allocation2], %s203
        %p205 = pneg %p55
        %p206 = pneg %p52
        %s207 = sand.u32 %s70, 1
        %s208 = scalar_lea.sflag [#allocation6], %s207
        %s209 = sand.u32 %s70, 1
        %s210 = smul.addr %s209, 64
        %s211 = scalar_lea.vmem [#allocation5], %s210
        %p212 = pneg %p83
        %p213 = pneg %p80
        %p214 = pneg %p111
        %p215 = pneg %p108
        %s216 = sand.u32 %s98, 1
        %s217 = scalar_lea.sflag [#allocation4], %s216
        %s218 = sand.u32 %s98, 1
        %s219 = smul.addr %s218, 16
        %s220 = scalar_lea.vmem [#allocation7], %s219
        %s221 = smul.u32 2, %s27
        %s222 = smul.u32 2, %s27
        %v224 = vld [vmem:[%s184] sm:$0xff]
        %v225 = vpack.c.bf16 %v224, %v224
        %v226 = vld [vmem:[%s194] sm:$0xff]
        %v227 = vld [vmem:[%s194 + $0x8] sm:$0xff]
        %v228 = vld [vmem:[%s194 + $0x10] sm:$0xff]
        %v229 = vld [vmem:[%s194 + $0x18] sm:$0xff]
        %v230 = vld [vmem:[%s194 + $0x20] sm:$0xff]
        %v231 = vld [vmem:[%s194 + $0x28] sm:$0xff]
        %v232 = vld [vmem:[%s194 + $0x30] sm:$0xff]
        %v233 = vld [vmem:[%s194 + $0x38] sm:$0xff]
        %v234 = vpack.c.bf16 %v228, %v226
        %v235 = vpack.c.bf16 %v229, %v227
        %v236 = vpack.c.bf16 %v232, %v230
        %v237 = vpack.c.bf16 %v233, %v231
        %vm238 = vcmask 261120
        %v240 = vsel %vm238, %v225, 0
        %242 = vmatpush.bf16.msra.mxu0 0
        %243 = vmatpush.bf16.msra.mxu0 0
        %244 = vmatpush.bf16.msra.mxu0 0
        %245 = vmatpush.bf16.msra.mxu0 0
        %246 = vmatpush.bf16.msra.mxu0 0
        %247 = vmatpush.bf16.msra.mxu0 0
        %248 = vmatpush.bf16.msra.mxu0 %v236
        %249 = vmatpush.bf16.msra.mxu0 %v234
        %250 = vmatmul.bf16.gmra.mxu0 %v240
        %v251 = vpop.f32.mrf.mxu0
        %v252 = vadd.f32 0.0, %v251
        %v253 = vpop.f32.mrf.mxu0
        %254 = vdwg.mxu0
        %255 = vmatpush.bf16.msra.mxu0 0
        %256 = vmatpush.bf16.msra.mxu0 0
        %257 = vmatpush.bf16.msra.mxu0 0
        %258 = vmatpush.bf16.msra.mxu0 0
        %259 = vmatpush.bf16.msra.mxu0 0
        %260 = vmatpush.bf16.msra.mxu0 0
        %261 = vmatpush.bf16.msra.mxu0 %v237
        %262 = vmatpush.bf16.msra.mxu0 %v235
        %263 = vmatmul.bf16.gmra.mxu0 %v240
        %v264 = vpop.f32.mrf.mxu0
        %v265 = vadd.f32 0.0, %v264
        %v266 = vpop.f32.mrf.mxu0
        %267 = vdwg.mxu0
        %268 = vst [vmem:[%s220] sm:$0xff] %v252
        %269 = vst [vmem:[%s220 + $0x8] sm:$0xff] %v265
        %s270 = sand.u32 %s98, 1
        %s271 = scalar_lea.sflag [#allocation4], %s270
        %s272 = sand.u32 %s98, 1
        %s273 = smul.addr %s272, 16
        %s274 = scalar_lea.vmem [#allocation7], %s273
        // Predicated region
        $region37: #{tpu_custom_call.1} parent=27 // pred_check
          %p275 = pneg %p108
        $region38: #{tpu_custom_call.1} parent=27 // pred_check_branch
          %277 = sbr.rel (%p275) target = $region40
        $region39: #{tpu_custom_call.1} parent=27 // pred_region
          %s278 = smul.u32 2, %s27
          %280 = vsyncadd %s271, 0
          %s281 = smul.addr %s26, 2
          %s282 = sadd.s32 %s278, %s281
          %s283 = smul.addr %s282, 8
          %s284 = scalar_lea.hbm %s2, %s283
          %s286 = sshll.u32 %s274, 4
          %s287 = int_to_ptr.vmem [resolvable:$true] %s286
          %s288 = sshll.u32 %s284, 4
          %s289 = int_to_ptr.hbm [resolvable:$true] %s288
          %291 = dma.vmem_to_hbm [thread:$0]  %s287, 256, %s289, %s271
        $region40: #{tpu_custom_call.1} parent=27 // pred_fallthru
          _
      $region28: #{tpu_custom_call.1} parent=5 // pred_fallthru
        _
      %p292 = scmp.le.s32.totalorder 2, %s17
      // Predicated region
      $region41: #{tpu_custom_call.1} parent=5 // pred_check
        %p293 = pneg %p292
      $region42: #{tpu_custom_call.1} parent=5 // pred_check_branch
        %295 = sbr.rel (%p293) target = $region44
      $region43: #{tpu_custom_call.1} parent=5 // pred_region
        %s296 = ssub.s32 %s17, 2
        // Predicated region
        $region45: #{tpu_custom_call.1} parent=43 // pred_check
          %p297 = pneg %p114
        $region46: #{tpu_custom_call.1} parent=43 // pred_check_branch
          %299 = sbr.rel (%p297) target = $region48
        $region47: #{tpu_custom_call.1} parent=43 // pred_region
          %s300 = sand.u32 %s99, 1
          %s301 = scalar_lea.sflag [#allocation4], %s300
          %s302 = sand.u32 %s99, 1
          %s303 = smul.addr %s302, 16
          %s304 = scalar_lea.vmem [#allocation7], %s303
          %306 = dma.done %s301, 256
        $region48: #{tpu_custom_call.1} parent=43 // pred_fallthru
          _
      $region44: #{tpu_custom_call.1} parent=5 // pred_fallthru
        _
    $region6: #{tpu_custom_call.1} parent=1 // loop_footer
      %s21 = sadd.s32 1, %s17
    $region7: #{tpu_custom_call.1} parent=1 // loop_footer_branch
      %16 = sbr.rel target = $region3
    $region8: #{tpu_custom_call.1} parent=1 // loop_exit
      _
    %307 = vsyncpa [#allocation3], 1
    %s308 = scalar_lea.sflag [#allocation3], 1
    %309 = vsyncpa %s308, 1
    %310 = vsyncpa [#allocation6], 1
    %s311 = scalar_lea.sflag [#allocation6], 1
    %312 = vsyncpa %s311, 1
    %313 = vsyncpa [#allocation4], 1
    %s314 = scalar_lea.sflag [#allocation4], 1
    %315 = vsyncpa %s314, 1

</llo_original>
